<compile_context>
chip_gen: v7x
topology: tpu7x:2x2x1
jax: 0.10.0
libtpu: 0.0.40
codegen_flags: <defaults>
</compile_context>

<pallas_src>
import functools

import jax
import jax.numpy as jnp
from jax.experimental import pallas as pl
from jax.experimental.pallas import tpu as pltpu


# ---------------------------------------------------------------------------
# tile-size / padding helpers
# ---------------------------------------------------------------------------

def _pick_tile(dim, preferred, align):
    """Largest tile <= preferred that is a multiple of `align` and divides `dim`.
    Falls back to the full extent (always a legal BlockSpec) if none exists."""
    if dim <= preferred:
        return dim
    t = (preferred // align) * align
    while t >= align:
        if dim % t == 0:
            return t
        t -= align
    return dim


def _pad_axis(x, axis, multiple):
    """Zero-pad `axis` of `x` up to the next multiple of `multiple`."""
    size = x.shape[axis]
    pad = (-size) % multiple
    if pad == 0:
        return x
    widths = [(0, 0)] * x.ndim
    widths[axis] = (0, pad)
    return jnp.pad(x, widths)


def _vmem_capacity_bytes():
    """Physical VMEM of the attached TPU; generation-aware fallback if detection fails."""
    try:
        cap = getattr(pltpu.get_tpu_info(), "vmem_capacity_bytes", None)
        if cap:
            return int(cap)
    except Exception:
        pass
    try:
        kind = jax.devices()[0].device_kind.lower()
        if ("v4" in kind) or ("v5" in kind) or ("v6" in kind):
            return 128 * 1024 * 1024
    except Exception:
        pass
    return 64 * 1024 * 1024          # conservative: v7x per-TensorCore VMEM


def _choose_batch_tile(B, preferred=32):
    """Largest batch tile <= preferred (multiple of 8, divides B); prefers an even number
    of batch tiles so the 'parallel' batch axis splits evenly across a v7x megacore."""
    if B <= 8 or B % 8:
        return B                                  # single full-extent tile (always legal)
    cands = [t for t in range(8, min(preferred, B) + 1, 8) if B % t == 0]
    if not cands:
        return B
    even = [t for t in cands if (B // t) % 2 == 0]
    return max(even) if even else max(cands)


def _choose_seq_tile(S, TB, H, itemsize, vmem_cap):
    """Seq tile sized so the double-buffered hidden-state stream stays within ~1/4 of
    physical VMEM; capped at 512 since larger per-step DMAs are past the pipelining
    plateau (spend VMEM on batch tile / weights instead of deeper buffering)."""
    budget = vmem_cap // 4
    per_seq_row = max(1, 2 * TB * H * itemsize)   # 2 pipeline buffers
    max_ts = max(128, min(budget // per_seq_row, 512))
    return _pick_tile(S, max_ts, 128)


# ---------------------------------------------------------------------------
# kernels
# ---------------------------------------------------------------------------

def _masked_pool_project_kernel(hid_ref, mask_ref, w_ref, b_ref, out_ref,
                                acc_ref, den_ref):
    """Masked mean-pool over the seq axis (reduction grid axis 1) + dense projection."""
    j = pl.program_id(1)

    @pl.when(j == 0)
    def _init():
        acc_ref[...] = jnp.zeros_like(acc_ref)
        den_ref[...] = jnp.zeros_like(den_ref)

    hid = hid_ref[...].astype(jnp.float32)        # stream may be bf16; accumulate in f32
    mask = mask_ref[...]                          # (TB, TS, 1) f32, sublane-major
    acc_ref[...] += jnp.sum(hid * mask, axis=1)   # lane-splat broadcast, no relayout
    den_ref[...] += jnp.sum(mask, axis=1)

    @pl.when(j == pl.num_programs(1) - 1)
    def _finalize():
        pooled = acc_ref[...] / jnp.maximum(den_ref[...], 1e-9)   # torch.clamp(min=1e-9)
        proj = jnp.dot(pooled.astype(w_ref.dtype), w_ref[...],
                       preferred_element_type=jnp.float32)
        out_ref[...] = (proj + b_ref[...]).astype(out_ref.dtype)


def _mean_pool_project_kernel(hid_ref, w_ref, b_ref, out_ref, acc_ref, *,
                              inv_seq_len):
    """mean_pooling(attention_mask=None): no mask stream, static 1/S denominator."""
    j = pl.program_id(1)

    @pl.when(j == 0)
    def _init():
        acc_ref[...] = jnp.zeros_like(acc_ref)

    acc_ref[...] += jnp.sum(hid_ref[...].astype(jnp.float32), axis=1)

    @pl.when(j == pl.num_programs(1) - 1)
    def _finalize():
        pooled = acc_ref[...] * inv_seq_len
        proj = jnp.dot(pooled.astype(w_ref.dtype), w_ref[...],
                       preferred_element_type=jnp.float32)
        out_ref[...] = (proj + b_ref[...]).astype(out_ref.dtype)


def _scores_kernel(t_ref, pt_ref, temp_ref, out_ref):
    """scores tile = t_tile @ p_T_tile * temp (RHS already transposed in the wrapper)."""
    s = jnp.dot(t_ref[...], pt_ref[...], preferred_element_type=jnp.float32)
    out_ref[...] = s * temp_ref[0, 0]


# ---------------------------------------------------------------------------
# wrappers
# ---------------------------------------------------------------------------

def _pool_project(hidden, w, b, mask=None, *, matmul_dtype=jnp.float32,
                  stream_dtype=jnp.bfloat16, batch_tile=None, seq_tile=None):
    """(Masked) mean-pool over the sequence axis + dense projection, streamed over
    (batch, seq) tiles.  mask=None reproduces mean_pooling(attention_mask=None)."""
    B0, S0, H = hidden.shape
    D = w.shape[1]

    # The pooling kernel is HBM-bandwidth bound on the B*S*H stream: stream it in bf16
    # (accumulation inside the kernel stays f32).  stream_dtype=None keeps f32 parity.
    if stream_dtype is not None and hidden.dtype != stream_dtype:
        hidden = hidden.astype(stream_dtype)

    # Zero-pad to (8,128)-friendly extents when tiling is needed; exact because padded
    # tokens add 0 to the numerator / masked denominator, and the unmasked branch divides
    # by the ORIGINAL sequence length S0.
    if B0 > 8 and B0 % 8:
        hidden = _pad_axis(hidden, 0, 8)
        if mask is not None:
            mask = _pad_axis(mask, 0, 8)
    if S0 > 128 and S0 % 128:
        hidden = _pad_axis(hidden, 1, 128)
        if mask is not None:
            mask = _pad_axis(mask, 1, 128)
    B, S, _ = hidden.shape

    itemsize = jnp.dtype(hidden.dtype).itemsize
    vmem_cap = _vmem_capacity_bytes()
    TB = batch_tile if batch_tile is not None else _choose_batch_tile(B)
    TS = seq_tile if seq_tile is not None else _choose_seq_tile(S, TB, H, itemsize, vmem_cap)
    assert B % TB == 0 and (TB == B or TB % 8 == 0), (B, TB)
    assert S % TS == 0 and (TS == S or TS % 128 == 0), (S, TS)
    grid = (B // TB, S // TS)

    if matmul_dtype != jnp.float32:
        w = w.astype(matmul_dtype)                # native MXU rate + half the weight DMA
    b2 = b.reshape(1, D).astype(jnp.float32)      # lane-aligned row broadcast

    hid_spec = pl.BlockSpec((TB, TS, H), lambda i, j: (i, j, 0))
    # Constant-index blocks: fetched once and kept VMEM-resident across the grid.
    w_spec = pl.BlockSpec((H, D), lambda i, j: (0, 0))
    b_spec = pl.BlockSpec((1, D), lambda i, j: (0, 0))
    out_spec = pl.BlockSpec((TB, D), lambda i, j: (i, 0))   # resident across the seq axis

    compiler_params = pltpu.CompilerParams(
        dimension_semantics=("parallel", "arbitrary"),
        vmem_limit_bytes=min(int(vmem_cap * 3 // 4), 96 * 1024 * 1024),
    )
    flops = 2 * B * S * H + 2 * B * H * D
    w_bytes = jnp.dtype(w.dtype).itemsize * H * D
    out_shape = jax.ShapeDtypeStruct((B, D), jnp.float32)

    if mask is not None:
        # Mask delivered as (B, S, 1): sublane-major like the hidden states, so the
        # in-kernel broadcast is a cheap lane splat (no per-step XLU relayout).
        mask3 = mask.astype(jnp.float32).reshape(B, S, 1)
        out = pl.pallas_call(
            _masked_pool_project_kernel,
            out_shape=out_shape,
            grid=grid,
            in_specs=[hid_spec,
                      pl.BlockSpec((TB, TS, 1), lambda i, j: (i, j, 0)),
                      w_spec, b_spec],
            out_specs=out_spec,
            scratch_shapes=[pltpu.VMEM((TB, H), jnp.float32),
                            pltpu.VMEM((TB, 1), jnp.float32)],
            compiler_params=compiler_params,
            cost_estimate=pl.CostEstimate(
                flops=flops, transcendentals=0,
                bytes_accessed=itemsize * B * S * H + 4 * (B * S + B * D + D) + w_bytes),
        )(hidden, mask3, w, b2)
    else:
        kernel = functools.partial(_mean_pool_project_kernel, inv_seq_len=1.0 / S0)
        out = pl.pallas_call(
            kernel,
            out_shape=out_shape,
            grid=grid,
            in_specs=[hid_spec, w_spec, b_spec],
            out_specs=out_spec,
            scratch_shapes=[pltpu.VMEM((TB, H), jnp.float32)],
            compiler_params=compiler_params,
            cost_estimate=pl.CostEstimate(
                flops=flops, transcendentals=0,
                bytes_accessed=itemsize * B * S * H + 4 * (B * D + D) + w_bytes),
        )(hidden, w, b2)

    return out if B == B0 else out[:B0]


def _similarity_scores(t_enc, p_enc, temp, *, matmul_dtype=jnp.float32):
    """scores = t_enc @ p_enc.T * temp, tiled so the output stays lane-dense."""
    B, D = t_enc.shape
    if matmul_dtype != jnp.float32:
        # Cast once here (not per output tile inside the kernel) and halve the input DMA.
        t_enc = t_enc.astype(matmul_dtype)
        p_enc = p_enc.astype(matmul_dtype)
    # Pre-transpose the small (B, 512) image encodings so the kernel is a pure MXU matmul
    # with no per-tile XLU transpose of the RHS.
    p_t = p_enc.T
    TBi = _pick_tile(B, 256, 8)      # sublane tile of the output
    TBj = _pick_tile(B, 512, 128)    # lane tile of the output
    grid = (B // TBi, B // TBj)
    itemsize = jnp.dtype(t_enc.dtype).itemsize
    return pl.pallas_call(
        _scores_kernel,
        out_shape=jax.ShapeDtypeStruct((B, B), jnp.float32),
        grid=grid,
        in_specs=[pl.BlockSpec((TBi, D), lambda i, j: (i, 0)),
                  pl.BlockSpec((D, TBj), lambda i, j: (0, j)),
                  pl.BlockSpec(memory_space=pltpu.MemorySpace.SMEM)],
        out_specs=pl.BlockSpec((TBi, TBj), lambda i, j: (i, j)),
        compiler_params=pltpu.CompilerParams(
            dimension_semantics=("parallel", "parallel")),
        cost_estimate=pl.CostEstimate(
            flops=2 * B * B * D, transcendentals=0,
            bytes_accessed=itemsize * 2 * B * D + 4 * B * B + 4),
    )(t_enc, p_t, temp)


def clip_forward(text_hidden, attn_mask, image_hidden,
                 text_w, text_b, image_w, image_b, temp, *,
                 matmul_dtype=jnp.float32, stream_dtype=jnp.bfloat16,
                 batch_tile=None, seq_tile=None):
    """ClipModel.forward head (pooling='mean', img_pivot=True).

    text_hidden : (B, St, Ht)      -- text_encoder(...).last_hidden_state
    attn_mask   : (B, St)          -- caption attention mask
    image_hidden: (B, Si, Hi)      -- image_encoder(...).last_hidden_state
    text_w (Ht,D)/text_b (D,), image_w (Hi,D)/image_b (D,) -- dense heads (input-major W)
    temp        : scalar / (1,) / (1, 1) -- learnable temperature
    matmul_dtype: f32 for parity, bf16 for native MXU throughput (accumulation stays f32)
    stream_dtype: dtype the hidden states are streamed in (bf16 default; None = keep input)
    returns scores: (B, B) f32
    """
    temp = jnp.asarray(temp, jnp.float32).reshape(1, 1)
    t_enc = _pool_project(text_hidden, text_w, text_b, mask=attn_mask,
                          matmul_dtype=matmul_dtype, stream_dtype=stream_dtype,
                          batch_tile=batch_tile, seq_tile=seq_tile)
    p_enc = _pool_project(image_hidden, image_w, image_b, mask=None,
                          matmul_dtype=matmul_dtype, stream_dtype=stream_dtype,
                          batch_tile=batch_tile, seq_tile=seq_tile)
    return _similarity_scores(t_enc, p_enc, temp, matmul_dtype=matmul_dtype)


def reference_forward(text_hidden, attn_mask, image_hidden,
                      text_w, text_b, image_w, image_b, temp):
    """Plain-JAX reference mirroring the PyTorch forward (pooling='mean', img_pivot=True)."""
    def mean_pool(h, m):
        m = m[:, :, None]
        return jnp.sum(h * m, axis=1) / jnp.maximum(jnp.sum(m, axis=1), 1e-9)

    hi = jax.lax.Precision.HIGHEST
    t_enc = jnp.dot(mean_pool(text_hidden, attn_mask), text_w, precision=hi) + text_b
    p_enc = jnp.dot(mean_pool(image_hidden,
                              jnp.ones(image_hidden.shape[:-1], jnp.float32)),
                    image_w, precision=hi) + image_b
    return jnp.dot(t_enc, p_enc.T, precision=hi) * jnp.reshape(temp, (1, 1))[0, 0]


# ---------------------------------------------------------------------------
# demo / correctness checks
# ---------------------------------------------------------------------------

if __name__ == "__main__":
    D = 512  # nn.Linear(..., 512)
    temp = jnp.ones((1, 1), dtype=jnp.float32)   # nn.Parameter(torch.ones(1))

    # ---- test 1: small shapes consistent with the module's forward ----
    B, St, Ht = 2, 8, 32
    Si, Hi = 8, 32

    key = jax.random.PRNGKey(0)
    k1, k2, k3, k4, k5, k6 = jax.random.split(key, 6)
    text_hidden = jax.random.normal(k1, (B, St, Ht), dtype=jnp.float32)
    image_hidden = jax.random.normal(k2, (B, Si, Hi), dtype=jnp.float32)
    attn_mask = jnp.array([[1, 1, 1, 1, 1, 1, 1, 1],
                           [1, 1, 1, 1, 1, 0, 0, 0]], dtype=jnp.float32)
    text_w = jax.random.normal(k3, (Ht, D), dtype=jnp.float32) * 0.02
    text_b = jax.random.normal(k4, (D,), dtype=jnp.float32) * 0.02
    image_w = jax.random.normal(k5, (Hi, D), dtype=jnp.float32) * 0.02
    image_b = jax.random.normal(k6, (D,), dtype=jnp.float32) * 0.02

    ref = reference_forward(text_hidden, attn_mask, image_hidden,
                            text_w, text_b, image_w, image_b, temp)

    # f32 parity path: stream and matmul in f32.
    s_f32 = jax.block_until_ready(
        clip_forward(text_hidden, attn_mask, image_hidden,
                     text_w, text_b, image_w, image_b, temp,
                     matmul_dtype=jnp.float32, stream_dtype=None))
    assert s_f32.shape == (B, B)
    assert jnp.allclose(s_f32, ref, atol=2e-3, rtol=2e-2), (s_f32, ref)

    # performance path: bf16 hidden-state streaming + bf16 MXU matmuls, f32 accumulation.
    s_fast = jax.block_until_ready(
        clip_forward(text_hidden, attn_mask, image_hidden,
                     text_w, text_b, image_w, image_b, temp,
                     matmul_dtype=jnp.bfloat16, stream_dtype=jnp.bfloat16))
    assert jnp.allclose(s_fast, ref, atol=1e-2, rtol=5e-2), (s_fast, ref)

    # ---- test 2: multi-tile seq reduction + non-divisible seq (zero-pad) path ----
    B2, S2, H2 = 16, 200, 128
    j1, j2, j3, j4, j5, j6, j7 = jax.random.split(jax.random.PRNGKey(1), 7)
    th2 = jax.random.normal(j1, (B2, S2, H2), dtype=jnp.float32)
    ih2 = jax.random.normal(j2, (B2, S2, H2), dtype=jnp.float32)
    lens = 1 + jax.random.randint(j3, (B2,), 0, S2)
    am2 = (jnp.arange(S2)[None, :] < lens[:, None]).astype(jnp.float32)
    tw2 = jax.random.normal(j4, (H2, D), dtype=jnp.float32) * 0.02
    tb2 = jax.random.normal(j5, (D,), dtype=jnp.float32) * 0.02
    iw2 = jax.random.normal(j6, (H2, D), dtype=jnp.float32) * 0.02
    ib2 = jax.random.normal(j7, (D,), dtype=jnp.float32) * 0.02

    ref2 = reference_forward(th2, am2, ih2, tw2, tb2, iw2, ib2, temp)
    s2 = jax.block_until_ready(
        clip_forward(th2, am2, ih2, tw2, tb2, iw2, ib2, temp,
                     matmul_dtype=jnp.float32, stream_dtype=jnp.bfloat16,
                     batch_tile=8, seq_tile=128))
    assert s2.shape == (B2, B2)
    assert jnp.allclose(s2, ref2, atol=1e-2, rtol=5e-2), (s2, ref2)

    print("KERNEL_OK")
</pallas_src>

<mosaic_0001>
module attributes {stable_mosaic.version = 11 : i64} {
  func.func @_masked_pool_project_kernel(%arg0: i32, %arg1: i32, %arg2: memref<2x8x32xf32, #tpu.memory_space<vmem>>, %arg3: memref<2x8x1xf32, #tpu.memory_space<vmem>>, %arg4: memref<32x512xf32, #tpu.memory_space<vmem>>, %arg5: memref<1x512xf32, #tpu.memory_space<vmem>>, %arg6: memref<2x512xf32, #tpu.memory_space<vmem>>, %arg7: memref<2x32xf32, #tpu.memory_space<vmem>>, %arg8: memref<2x1xf32, #tpu.memory_space<vmem>>) attributes {dimension_semantics = [#tpu.dimension_semantics<parallel>, #tpu.dimension_semantics<arbitrary>], iteration_bounds = array<i64: 1, 1>, scalar_prefetch = 0 : i64, scratch_operands = 2 : i64, tpu.core_type = #tpu.core_type<tc>, window_params = [{transform_indices = @transform_0, window_bounds = array<i64: 2, 8, 32>}, {transform_indices = @transform_1, window_bounds = array<i64: 2, 8, 1>}, {pipeline_mode = #tpu.pipeline_mode<synchronous>, transform_indices = @transform_2, window_bounds = array<i64: 32, 512>}, {pipeline_mode = #tpu.pipeline_mode<synchronous>, transform_indices = @transform_3, window_bounds = array<i64: 1, 512>}, {transform_indices = @transform_4, window_bounds = array<i64: 2, 512>}]} {
    %c0_i32 = arith.constant 0 : i32
    %0 = arith.cmpi eq, %arg1, %c0_i32 : i32
    %1 = arith.extui %0 : i1 to i32
    %c0_i32_0 = arith.constant 0 : i32
    %2 = arith.cmpi ne, %1, %c0_i32_0 : i32
    scf.if %2 {
      %cst_17 = arith.constant 0.000000e+00 : f32
      %18 = vector.broadcast %cst_17 : f32 to vector<2x32xf32>
      %c0_18 = arith.constant 0 : index
      %c0_19 = arith.constant 0 : index
      %19 = vector.load %arg7[%c0_18, %c0_19] : memref<2x32xf32, #tpu.memory_space<vmem>>, vector<2x32xf32>
      tpu.vector_store %arg7[%c0_18, %c0_19], %18 {strides = array<i32>} : memref<2x32xf32, #tpu.memory_space<vmem>>, vector<2x32xf32>,
      %cst_20 = arith.constant 0.000000e+00 : f32
      %20 = vector.broadcast %cst_20 : f32 to vector<2x1xf32>
      %c0_21 = arith.constant 0 : index
      %c0_22 = arith.constant 0 : index
      %21 = vector.load %arg8[%c0_21, %c0_22] : memref<2x1xf32, #tpu.memory_space<vmem>>, vector<2x1xf32>
      tpu.vector_store %arg8[%c0_21, %c0_22], %20 {strides = array<i32>} : memref<2x1xf32, #tpu.memory_space<vmem>>, vector<2x1xf32>,
    } else {
    }
    %c0 = arith.constant 0 : index
    %c0_1 = arith.constant 0 : index
    %c0_2 = arith.constant 0 : index
    %3 = vector.load %arg2[%c0, %c0_1, %c0_2] : memref<2x8x32xf32, #tpu.memory_space<vmem>>, vector<2x8x32xf32>
    %c0_3 = arith.constant 0 : index
    %c0_4 = arith.constant 0 : index
    %c0_5 = arith.constant 0 : index
    %4 = vector.load %arg3[%c0_3, %c0_4, %c0_5] : memref<2x8x1xf32, #tpu.memory_space<vmem>>, vector<2x8x1xf32>
    %c0_6 = arith.constant 0 : index
    %c0_7 = arith.constant 0 : index
    %5 = vector.load %arg7[%c0_6, %c0_7] : memref<2x32xf32, #tpu.memory_space<vmem>>, vector<2x32xf32>
    %6 = vector.broadcast %4 : vector<2x8x1xf32> to vector<2x8x32xf32>
    %7 = arith.mulf %3, %6 : vector<2x8x32xf32>
    %cst = arith.constant dense<0.000000e+00> : vector<2x32xf32>
    %8 = vector.multi_reduction <add>, %7, %cst [1] : vector<2x8x32xf32> to vector<2x32xf32>
    %9 = arith.addf %5, %8 : vector<2x32xf32>
    %c0_8 = arith.constant 0 : index
    %c0_9 = arith.constant 0 : index
    %10 = vector.load %arg7[%c0_8, %c0_9] : memref<2x32xf32, #tpu.memory_space<vmem>>, vector<2x32xf32>
    tpu.vector_store %arg7[%c0_8, %c0_9], %9 {strides = array<i32>} : memref<2x32xf32, #tpu.memory_space<vmem>>, vector<2x32xf32>,
    %c0_10 = arith.constant 0 : index
    %c0_11 = arith.constant 0 : index
    %11 = vector.load %arg8[%c0_10, %c0_11] : memref<2x1xf32, #tpu.memory_space<vmem>>, vector<2x1xf32>
    %cst_12 = arith.constant dense<0.000000e+00> : vector<2x1xf32>
    %12 = vector.multi_reduction <add>, %4, %cst_12 [1] : vector<2x8x1xf32> to vector<2x1xf32>
    %13 = arith.addf %11, %12 : vector<2x1xf32>
    %c0_13 = arith.constant 0 : index
    %c0_14 = arith.constant 0 : index
    %14 = vector.load %arg8[%c0_13, %c0_14] : memref<2x1xf32, #tpu.memory_space<vmem>>, vector<2x1xf32>
    tpu.vector_store %arg8[%c0_13, %c0_14], %13 {strides = array<i32>} : memref<2x1xf32, #tpu.memory_space<vmem>>, vector<2x1xf32>,
    %c0_i32_15 = arith.constant 0 : i32
    %15 = arith.cmpi eq, %arg1, %c0_i32_15 : i32
    %16 = arith.extui %15 : i1 to i32
    %c0_i32_16 = arith.constant 0 : i32
    %17 = arith.cmpi ne, %16, %c0_i32_16 : i32
    scf.if %17 {
      %c0_17 = arith.constant 0 : index
      %c0_18 = arith.constant 0 : index
      %18 = vector.load %arg7[%c0_17, %c0_18] : memref<2x32xf32, #tpu.memory_space<vmem>>, vector<2x32xf32>
      %c0_19 = arith.constant 0 : index
      %c0_20 = arith.constant 0 : index
      %19 = vector.load %arg8[%c0_19, %c0_20] : memref<2x1xf32, #tpu.memory_space<vmem>>, vector<2x1xf32>
      %cst_21 = arith.constant 9.99999971E-10 : f32
      %20 = vector.broadcast %cst_21 : f32 to vector<2x1xf32>
      %21 = arith.maximumf %19, %20 : vector<2x1xf32>
      %22 = vector.broadcast %21 : vector<2x1xf32> to vector<2x32xf32>
      %23 = arith.divf %18, %22 : vector<2x32xf32>
      %c0_22 = arith.constant 0 : index
      %c0_23 = arith.constant 0 : index
      %24 = vector.load %arg4[%c0_22, %c0_23] : memref<32x512xf32, #tpu.memory_space<vmem>>, vector<32x512xf32>
      %cst_24 = arith.constant dense<0.000000e+00> : vector<2x512xf32>
      %25 = tpu.matmul %23, %24, %cst_24 {dimension_numbers = #tpu.dot_dimension_numbers<[1], [0], [0], [1], [0, 0, 1, 1], [], []>} : vector<2x32xf32>, vector<32x512xf32>, vector<2x512xf32> -> vector<2x512xf32>
      %c0_25 = arith.constant 0 : index
      %c0_26 = arith.constant 0 : index
      %26 = vector.load %arg5[%c0_25, %c0_26] : memref<1x512xf32, #tpu.memory_space<vmem>>, vector<1x512xf32>
      %27 = vector.broadcast %26 : vector<1x512xf32> to vector<2x512xf32>
      %28 = arith.addf %25, %27 : vector<2x512xf32>
      %c0_27 = arith.constant 0 : index
      %c0_28 = arith.constant 0 : index
      %29 = vector.load %arg6[%c0_27, %c0_28] : memref<2x512xf32, #tpu.memory_space<vmem>>, vector<2x512xf32>
      tpu.vector_store %arg6[%c0_27, %c0_28], %28 {strides = array<i32>} : memref<2x512xf32, #tpu.memory_space<vmem>>, vector<2x512xf32>,
    } else {
    }
    return
  }
  func.func @transform_0(%arg0: i32, %arg1: i32) -> (i32, i32, i32) {
    %c0_i32 = arith.constant 0 : i32
    %c0_i32_0 = arith.constant 0 : i32
    return %arg0, %arg1, %c0_i32 : i32, i32, i32
  }
  func.func @transform_1(%arg0: i32, %arg1: i32) -> (i32, i32, i32) {
    %c0_i32 = arith.constant 0 : i32
    %c0_i32_0 = arith.constant 0 : i32
    return %arg0, %arg1, %c0_i32 : i32, i32, i32
  }
  func.func @transform_2(%arg0: i32, %arg1: i32) -> (i32, i32) {
    %c0_i32 = arith.constant 0 : i32
    %c0_i32_0 = arith.constant 0 : i32
    %c0_i32_1 = arith.constant 0 : i32
    return %c0_i32, %c0_i32_0 : i32, i32
  }
  func.func @transform_3(%arg0: i32, %arg1: i32) -> (i32, i32) {
    %c0_i32 = arith.constant 0 : i32
    %c0_i32_0 = arith.constant 0 : i32
    %c0_i32_1 = arith.constant 0 : i32
    return %c0_i32, %c0_i32_0 : i32, i32
  }
  func.func @transform_4(%arg0: i32, %arg1: i32) -> (i32, i32) {
    %c0_i32 = arith.constant 0 : i32
    %c0_i32_0 = arith.constant 0 : i32
    return %arg0, %c0_i32 : i32, i32
  }
}

</mosaic_0001>

<llo_original>
// kernel: tpu_custom_call.1
$region0: #{tpu_custom_call.1}
  #allocation0 [shape = 'u32[]', space=smem, size = 0x4, offset = 0x4, fixed_abs, tag = 'smem constant byte address 0x4 - core index']
  #allocation1 [shape = 'u32[144,128]{1,0:T(1,128)}', space=vmem, size = 0x12000, scoped, tag = 'internal scratch']
  #allocation2 [shape = 'f32[2,32]{1,0:T(2,128)}', space=vmem, size = 0x400, scoped, tag = 'scratch operand']
  #allocation3 [shape = 'f32[2,1]{1,0:T(2,128)}', space=vmem, size = 0x400, scoped, tag = 'scratch operand']
  %s0 = inlined_call_operand.vmem [shape: f32[2,8,32], index: 0, kind: input, shape index: {}]
  %s1 = inlined_call_operand.vmem [shape: f32[2,8,1], index: 1, kind: input, shape index: {}]
  %s2 = inlined_call_operand.hbm [shape: f32[32,512], index: 2, kind: input, shape index: {}]
  %s3 = inlined_call_operand.vmem [shape: f32[1,512], index: 3, kind: input, shape index: {}]
  %s4 = inlined_call_operand.hbm [shape: f32[2,512], index: 4, kind: output, shape index: {}]
  %s5 = sld [smem:[#allocation0]]
  $region38: #{tpu_custom_call.1} parent=0
    _
  %s7 = ssub.s32 1, %s5
  %s8 = scalar_select 0, %s7, %s5
  $region1: #{tpu_custom_call.1} parent=0
    #allocation4 [shape = 'u8[65536]{0}', space=vmem, size = 0x10000, scoped, tag = 'input window, operand 2, single buffered']
    #allocation5 [shape = 's32[1]{0}', space=sflag, size = 0x4, scoped, tag = 'scoped memory for tpu_custom_call.1']
    #allocation6 [shape = 's32[1]{0}', space=sflag, size = 0x4, scoped, tag = 'scoped memory for tpu_custom_call.1']
    #allocation7 [shape = 'u8[4096]{0}', space=vmem, size = 0x1000, scoped, tag = 'output window, operand 0, single buffered']
    %9 = vsyncpa [#allocation5], 0
    %10 = vsyncpa [#allocation6], 0
    // Predicated region
    $region2: #{tpu_custom_call.1} parent=1 // pred_check
      _
    $region3: #{tpu_custom_call.1} parent=1 // pred_check_branch
      %12 = sbr.rel (0) target = $region5
    $region4: #{tpu_custom_call.1} parent=1 // pred_region
      _
    $region5: #{tpu_custom_call.1} parent=1 // pred_fallthru
      _
    // Predicated region
    $region6: #{tpu_custom_call.1} parent=1 // pred_check
      _
    $region7: #{tpu_custom_call.1} parent=1 // pred_check_branch
      %14 = sbr.rel (0) target = $region9
    $region8: #{tpu_custom_call.1} parent=1 // pred_region
      _
    $region9: #{tpu_custom_call.1} parent=1 // pred_fallthru
      _
    // Predicated region
    $region10: #{tpu_custom_call.1} parent=1 // pred_check
      _
    $region11: #{tpu_custom_call.1} parent=1 // pred_check_branch
      %16 = sbr.rel (0) target = $region13
    $region12: #{tpu_custom_call.1} parent=1 // pred_region
      %s18 = ssub.s32 2048, 2048
      %19 = vsyncadd [#allocation5], %s18
      %s20 = sshll.u32 [#allocation4], 4
      %s21 = int_to_ptr.vmem [resolvable:$true] %s20
      %26 = dma.hbm_to_vmem [thread:$0]  %s2, 2048, %s21, [#allocation5], 512, 512, 32
    $region13: #{tpu_custom_call.1} parent=1 // pred_fallthru
      _
    // Predicated region
    $region14: #{tpu_custom_call.1} parent=1 // pred_check
      _
    $region15: #{tpu_custom_call.1} parent=1 // pred_check_branch
      %28 = sbr.rel (0) target = $region17
    $region16: #{tpu_custom_call.1} parent=1 // pred_region
      _
    $region17: #{tpu_custom_call.1} parent=1 // pred_fallthru
      _
    // Predicated region
    $region18: #{tpu_custom_call.1} parent=1 // pred_check
      _
    $region19: #{tpu_custom_call.1} parent=1 // pred_check_branch
      %30 = sbr.rel (0) target = $region21
    $region20: #{tpu_custom_call.1} parent=1 // pred_region
      %31 = dma.done [#allocation5], 2048
    $region21: #{tpu_custom_call.1} parent=1 // pred_fallthru
      _
    %p32 = scmp.eq.s32.totalorder 0, 0
    // Predicated region
    $region22: #{tpu_custom_call.1} parent=1 // pred_check
      %p33 = pneg %p32
    $region23: #{tpu_custom_call.1} parent=1 // pred_check_branch
      %35 = sbr.rel (%p33) target = $region25
    $region24: #{tpu_custom_call.1} parent=1 // pred_region
      %vm36 = vcmask 254976
      %37 = vst.msk [vmem:[#allocation2] sm:$0x3] %vm36, 0.0
      %vm38 = vcmask 1024
      %39 = vst.msk [vmem:[#allocation3] sm:$0x3] %vm38, 0.0
    $region25: #{tpu_custom_call.1} parent=1 // pred_fallthru
      _
    %v40 = vld [vmem:[%s0] sm:$0xff]
    %v41 = vld [vmem:[%s0 + $0x8] sm:$0xff]
    %v42 = vld [vmem:[%s1] sm:$0xff]
    %v43 = vld [vmem:[%s1 + $0x8] sm:$0xff]
    %v44 = vld [vmem:[#allocation2] sm:$0x3]
    %46 = vset.pattern.permute.xlu0 0
    %47 = vperm.xlu0 %46, %v42
    %v48 = vpop.permute.xlu0 %47
    %51 = vset.pattern.permute.xlu0 0
    %52 = vperm.xlu0 %51, %v43
    %v53 = vpop.permute.xlu0 %52
    %v55 = vmul.f32 %v40, %v48
    %v56 = vmul.f32 %v41, %v53
    %vm57 = vcmask 261120
    %v58 = vsel %vm57, %v55, 0.0
    %v59 = vrot.slane %v58, 4
    %v60 = vadd.f32 %v58, %v59
    %v61 = vrot.slane %v60, 2
    %v62 = vadd.f32 %v60, %v61
    %v63 = vrot.slane %v62, 1
    %v64 = vadd.f32 %v62, %v63
    %v65 = vsel %vm57, %v56, 0.0
    %v66 = vrot.slane %v65, 4
    %v67 = vadd.f32 %v65, %v66
    %v68 = vrot.slane %v67, 2
    %v69 = vadd.f32 %v67, %v68
    %v70 = vrot.slane %v69, 1
    %v71 = vadd.f32 %v69, %v70
    %vm74 = vcmask 1041409
    %v75 = vsel %vm74, %v71, %v64
    %v77 = vadd.f32 %v44, %v75
    %vm78 = vcmask 254976
    %79 = vst.msk [vmem:[#allocation2] sm:$0x3] %vm78, %v77
    %v80 = vld [vmem:[#allocation3] sm:$0x3]
    %vm81 = vcmask 7168
    %v82 = vsel %vm81, %v42, 0.0
    %v83 = vrot.slane %v82, 4
    %v84 = vadd.f32 %v82, %v83
    %v85 = vrot.slane %v84, 2
    %v86 = vadd.f32 %v84, %v85
    %v87 = vrot.slane %v86, 1
    %v88 = vadd.f32 %v86, %v87
    %v89 = vsel %vm81, %v43, 0.0
    %v90 = vrot.slane %v89, 4
    %v91 = vadd.f32 %v89, %v90
    %v92 = vrot.slane %v91, 2
    %v93 = vadd.f32 %v91, %v92
    %v94 = vrot.slane %v93, 1
    %v95 = vadd.f32 %v93, %v94
    %v98 = vsel %vm74, %v95, %v88
    %v100 = vadd.f32 %v80, %v98
    %vm101 = vcmask 1024
    %102 = vst.msk [vmem:[#allocation3] sm:$0x3] %vm101, %v100
    // Predicated region
    $region26: #{tpu_custom_call.1} parent=1 // pred_check
      %p103 = pneg %p32
    $region27: #{tpu_custom_call.1} parent=1 // pred_check_branch
      %105 = sbr.rel (%p103) target = $region29
    $region28: #{tpu_custom_call.1} parent=1 // pred_region
      %v106 = vld [vmem:[#allocation2] sm:$0x3]
      %v107 = vld [vmem:[#allocation3] sm:$0x3]
      %v108 = vmax.f32 %v107, 1e-09
      %110 = vset.pattern.permute.xlu0 0
      %111 = vperm.xlu0 %110, %v108
      %v112 = vpop.permute.xlu0 %111
      %v114 = vrcp.pop %v112
      %v115 = vmul.f32 %v106, %v114
      %v116 = vld [vmem:[#allocation4] sm:$0xff]
      %v117 = vld [vmem:[#allocation4 + $0x8] sm:$0xff]
      %v118 = vld [vmem:[#allocation4 + $0x10] sm:$0xff]
      %v119 = vld [vmem:[#allocation4 + $0x18] sm:$0xff]
      %v120 = vld [vmem:[#allocation4 + $0x20] sm:$0xff]
      %v121 = vld [vmem:[#allocation4 + $0x28] sm:$0xff]
      %v122 = vld [vmem:[#allocation4 + $0x30] sm:$0xff]
      %v123 = vld [vmem:[#allocation4 + $0x38] sm:$0xff]
      %v124 = vld [vmem:[#allocation4 + $0x40] sm:$0xff]
      %v125 = vld [vmem:[#allocation4 + $0x48] sm:$0xff]
      %v126 = vld [vmem:[#allocation4 + $0x50] sm:$0xff]
      %v127 = vld [vmem:[#allocation4 + $0x58] sm:$0xff]
      %v128 = vld [vmem:[#allocation4 + $0x60] sm:$0xff]
      %v129 = vld [vmem:[#allocation4 + $0x68] sm:$0xff]
      %v130 = vld [vmem:[#allocation4 + $0x70] sm:$0xff]
      %v131 = vld [vmem:[#allocation4 + $0x78] sm:$0xff]
      %v132 = vld [vmem:[%s3] sm:$0xf]
      %v134 = vlaneseq
      %v135 = vshrl.u32 %v134, 7
      %v136 = vsub.s32 0, %v135
      %v137 = vrot.slane %v132, %v136
      %v138 = vlaneseq
      %v139 = vshrl.u32 %v138, 7
      %v140 = vsub.s32 1, %v139
      %v141 = vrot.slane %v132, %v140
      %v142 = vlaneseq
      %v143 = vshrl.u32 %v142, 7
      %v144 = vsub.s32 2, %v143
      %v145 = vrot.slane %v132, %v144
      %v146 = vlaneseq
      %v147 = vshrl.u32 %v146, 7
      %v148 = vsub.s32 3, %v147
      %v149 = vrot.slane %v132, %v148
      %v155 = vsel %vm57, %v115, 0
      %157 = vmatprep.subr.mxu0 %v117
      %158 = vmatpush1.msra.mxu0 %v116
      %159 = vmatprep.subr.mxu0 %v121
      %160 = vmatpush1.msra.mxu0 %v120
      %161 = vmatprep.subr.mxu0 %v125
      %162 = vmatpush1.msra.mxu0 %v124
      %163 = vmatprep.subr.mxu0 %v129
      %164 = vmatpush1.msra.mxu0 %v128
      %165 = vmatprep.subr.mxu0 0.0
      %166 = vmatpush1.msra.mxu0 0.0
      %167 = vmatprep.subr.mxu0 0.0
      %168 = vmatpush1.msra.mxu0 0.0
      %169 = vmatprep.subr.mxu0 0.0
      %170 = vmatpush1.msra.mxu0 0.0
      %171 = vmatprep.subr.mxu0 0.0
      %172 = vmatpush1.msra.mxu0 0.0
      %173 = vmatprep.subr.mxu0 0.0
      %174 = vmatpush1.msra.mxu0 0.0
      %175 = vmatprep.subr.mxu0 0.0
      %176 = vmatpush1.msra.mxu0 0.0
      %177 = vmatprep.subr.mxu0 0.0
      %178 = vmatpush1.msra.mxu0 0.0
      %179 = vmatprep.subr.mxu0 0.0
      %180 = vmatpush1.msra.mxu0 0.0
      %181 = vmatprep.subr.mxu0 0.0
      %182 = vmatpush1.msra.mxu0 0.0
      %183 = vmatprep.subr.mxu0 0.0
      %184 = vmatpush1.msra.mxu0 0.0
      %185 = vmatprep.subr.mxu0 0.0
      %186 = vmatpush1.msra.mxu0 0.0
      %187 = vmatprep.subr.mxu0 0.0
      %188 = vmatpush1.msra.mxu0 0.0
      %189 = vmatprep.subr.mxu0 0.0
      %190 = vmatpush1.msra.mxu0 0.0
      %191 = vmatprep.subr.mxu0 0.0
      %192 = vmatpush1.msra.mxu0 0.0
      %193 = vmatprep.subr.mxu0 0.0
      %194 = vmatpush1.msra.mxu0 0.0
      %195 = vmatprep.subr.mxu0 0.0
      %196 = vmatpush1.msra.mxu0 0.0
      %197 = vmatprep.subr.mxu0 0.0
      %198 = vmatpush1.msra.mxu0 0.0
      %199 = vmatprep.subr.mxu0 0.0
      %200 = vmatpush1.msra.mxu0 0.0
      %201 = vmatprep.subr.mxu0 0.0
      %202 = vmatpush1.msra.mxu0 0.0
      %203 = vmatprep.subr.mxu0 0.0
      %204 = vmatpush1.msra.mxu0 0.0
      %205 = vmatprep.subr.mxu0 0.0
      %206 = vmatpush1.msra.mxu0 0.0
      %207 = vmatprep.subr.mxu0 0.0
      %208 = vmatpush1.msra.mxu0 0.0
      %209 = vmatprep.subr.mxu0 0.0
      %210 = vmatpush1.msra.mxu0 0.0
      %211 = vmatprep.subr.mxu0 0.0
      %212 = vmatpush1.msra.mxu0 0.0
      %213 = vmatprep.subr.mxu0 0.0
      %214 = vmatpush1.msra.mxu0 0.0
      %215 = vmatprep.subr.mxu0 0.0
      %216 = vmatpush1.msra.mxu0 0.0
      %217 = vmatprep.subr.mxu0 0.0
      %218 = vmatpush1.msra.mxu0 0.0
      %219 = vmatprep.subr.mxu0 0.0
      %220 = vmatpush1.msra.mxu0 0.0
      %221 = vmatprep.mubr.f32.mxu0 0.0
      %222 = vmatmul.mubr.f32.gmra.mrb[0].mxu0 %v155
      %v223 = vpop.f32.mrb[0].mxu0
      %v224 = vadd.f32 %v137, %v223
      %v225 = vpop.f32.mrb[0].mxu0
      %v226 = vadd.f32 %v141, %v225
      %227 = vdwg.mxu0
      %228 = vmatprep.subr.mxu0 %v119
      %229 = vmatpush1.msra.mxu0 %v118
      %230 = vmatprep.subr.mxu0 %v123
      %231 = vmatpush1.msra.mxu0 %v122
      %232 = vmatprep.subr.mxu0 %v127
      %233 = vmatpush1.msra.mxu0 %v126
      %234 = vmatprep.subr.mxu0 %v131
      %235 = vmatpush1.msra.mxu0 %v130
      %236 = vmatprep.subr.mxu0 0.0
      %237 = vmatpush1.msra.mxu0 0.0
      %238 = vmatprep.subr.mxu0 0.0
      %239 = vmatpush1.msra.mxu0 0.0
      %240 = vmatprep.subr.mxu0 0.0
      %241 = vmatpush1.msra.mxu0 0.0
      %242 = vmatprep.subr.mxu0 0.0
      %243 = vmatpush1.msra.mxu0 0.0
      %244 = vmatprep.subr.mxu0 0.0
      %245 = vmatpush1.msra.mxu0 0.0
      %246 = vmatprep.subr.mxu0 0.0
      %247 = vmatpush1.msra.mxu0 0.0
      %248 = vmatprep.subr.mxu0 0.0
      %249 = vmatpush1.msra.mxu0 0.0
      %250 = vmatprep.subr.mxu0 0.0
      %251 = vmatpush1.msra.mxu0 0.0
      %252 = vmatprep.subr.mxu0 0.0
      %253 = vmatpush1.msra.mxu0 0.0
      %254 = vmatprep.subr.mxu0 0.0
      %255 = vmatpush1.msra.mxu0 0.0
      %256 = vmatprep.subr.mxu0 0.0
      %257 = vmatpush1.msra.mxu0 0.0
      %258 = vmatprep.subr.mxu0 0.0
      %259 = vmatpush1.msra.mxu0 0.0
      %260 = vmatprep.subr.mxu0 0.0
      %261 = vmatpush1.msra.mxu0 0.0
      %262 = vmatprep.subr.mxu0 0.0
      %263 = vmatpush1.msra.mxu0 0.0
      %264 = vmatprep.subr.mxu0 0.0
      %265 = vmatpush1.msra.mxu0 0.0
      %266 = vmatprep.subr.mxu0 0.0
      %267 = vmatpush1.msra.mxu0 0.0
      %268 = vmatprep.subr.mxu0 0.0
      %269 = vmatpush1.msra.mxu0 0.0
      %270 = vmatprep.subr.mxu0 0.0
      %271 = vmatpush1.msra.mxu0 0.0
      %272 = vmatprep.subr.mxu0 0.0
      %273 = vmatpush1.msra.mxu0 0.0
      %274 = vmatprep.subr.mxu0 0.0
      %275 = vmatpush1.msra.mxu0 0.0
      %276 = vmatprep.subr.mxu0 0.0
      %277 = vmatpush1.msra.mxu0 0.0
      %278 = vmatprep.subr.mxu0 0.0
      %279 = vmatpush1.msra.mxu0 0.0
      %280 = vmatprep.subr.mxu0 0.0
      %281 = vmatpush1.msra.mxu0 0.0
      %282 = vmatprep.subr.mxu0 0.0
      %283 = vmatpush1.msra.mxu0 0.0
      %284 = vmatprep.subr.mxu0 0.0
      %285 = vmatpush1.msra.mxu0 0.0
      %286 = vmatprep.subr.mxu0 0.0
      %287 = vmatpush1.msra.mxu0 0.0
      %288 = vmatprep.subr.mxu0 0.0
      %289 = vmatpush1.msra.mxu0 0.0
      %290 = vmatprep.subr.mxu0 0.0
      %291 = vmatpush1.msra.mxu0 0.0
      %292 = vmatprep.mubr.f32.mxu0 0.0
      %293 = vmatmul.mubr.f32.gmra.mrb[0].mxu0 %v155
      %v294 = vpop.f32.mrb[0].mxu0
      %v295 = vadd.f32 %v145, %v294
      %v296 = vpop.f32.mrb[0].mxu0
      %v297 = vadd.f32 %v149, %v296
      %298 = vdwg.mxu0
      %v303 = vcombine.low %v224, %v226
      %v304 = vcombine.low %v295, %v297
      %v306 = vunpack.c.l.s4 1983009808
      %v307 = vunpack.c.0.s8 %v306
      %v308 = vlaneseq
      %v309 = vshrl.u32 %v308, 7
      %v310 = vsub.s32 %v307, %v309
      %v311 = vrot.slane %v303, %v310
      %v313 = vunpack.c.l.s4 1983009808
      %v314 = vunpack.c.0.s8 %v313
      %v315 = vlaneseq
      %v316 = vshrl.u32 %v315, 7
      %v317 = vsub.s32 %v314, %v316
      %v318 = vrot.slane %v304, %v317
      %v319 = vcombine.low %v311, %v318
      %321 = vst [vmem:[#allocation7] sm:$0xff] %v319
    $region29: #{tpu_custom_call.1} parent=1 // pred_fallthru
      _
    // Predicated region
    $region30: #{tpu_custom_call.1} parent=1 // pred_check
      _
    $region31: #{tpu_custom_call.1} parent=1 // pred_check_branch
      %323 = sbr.rel (0) target = $region33
    $region32: #{tpu_custom_call.1} parent=1 // pred_region
      %s325 = ssub.s32 128, 128
      %326 = vsyncadd [#allocation6], %s325
      %s328 = sshll.u32 [#allocation7], 4
      %s329 = int_to_ptr.vmem [resolvable:$true] %s328
      %331 = dma.vmem_to_hbm [thread:$0]  %s329, 128, %s4, [#allocation6]
    $region33: #{tpu_custom_call.1} parent=1 // pred_fallthru
      _
    // Predicated region
    $region34: #{tpu_custom_call.1} parent=1 // pred_check
      _
    $region35: #{tpu_custom_call.1} parent=1 // pred_check_branch
      %333 = sbr.rel (0) target = $region37
    $region36: #{tpu_custom_call.1} parent=1 // pred_region
      %334 = dma.done [#allocation6], 128
    $region37: #{tpu_custom_call.1} parent=1 // pred_fallthru
      _
    %335 = vsyncpa [#allocation5], 1
    %336 = vsyncpa [#allocation6], 1

</llo_original>
